<compile_context>
chip_gen: v5e
topology: v5e:2x2
jax: 0.10.0
libtpu: 0.0.40
codegen_flags: <defaults>
</compile_context>

<pallas_src>
import math

import jax
import jax.numpy as jnp
from jax import lax
from jax.experimental import pallas as pl
from jax.experimental.pallas import tpu as pltpu


# --------------------------------------------------------------------------
# Pallas kernel
# --------------------------------------------------------------------------
def _make_kernel(C, H, W):
    HW = H * W

    def kernel(sel_ref, res_ref, x_ref, w_ref, out_ref, patch_ref):
        # grid = (target task, batch image, auxiliary source); aux is the
        # reduction axis -> the f32 out block is the resident accumulator.
        j = pl.program_id(2)

        @pl.when(j == 0)
        def _init():
            # residual: the target task's own features.
            out_ref[...] = res_ref[...].astype(jnp.float32)

        # Lane masks realising the *horizontal* zero padding of the 3x3 conv
        # (the vertical padding is physical in the flattened aux map).
        col = lax.broadcasted_iota(jnp.int32, (C, HW), 1) % W
        not_left = col != 0           # dx == 0 taps: w-1 out of range at w == 0
        not_right = col != (W - 1)    # dx == 2 taps: w+1 out of range at w == W-1

        x = x_ref[...]                # (C, L) row-padded, flattened aux map
        # im2col: each tap is a constant lane shift of the flattened map.
        for dy in range(3):
            for dx in range(3):
                k = dy * 3 + dx
                s = dy * W + dx
                tap = x[:, s:s + HW]
                if dx == 0:
                    tap = jnp.where(not_left, tap, jnp.zeros_like(tap))
                elif dx == 2:
                    tap = jnp.where(not_right, tap, jnp.zeros_like(tap))
                patch_ref[k * C:(k + 1) * C, :] = tap

        # Single fused MXU matmul: [W_att ; W_conv] @ im2col(x_aux) -> (2C, HW).
        y = jnp.dot(w_ref[...], patch_ref[...],
                    preferred_element_type=jnp.float32)
        # SABlock: sigmoid(attention logits) * conv features, accumulated.
        out_ref[...] += jax.nn.sigmoid(y[:C, :]) * y[C:, :]

    return kernel


def _fused_distill_call(res, xflat, wf, sel, C, H, W, compute_dtype):
    """res: (T, N, C, H*W); xflat: (A, N, C, L); wf: (T, A', 2C, 9C); sel: (T, A')."""
    T, N = res.shape[0], res.shape[1]
    Ao = wf.shape[1]
    HW = H * W
    L = xflat.shape[-1]

    cd = jnp.dtype(compute_dtype).itemsize
    est = (2 * C * L * cd                 # aux block (double buffered)
           + 2 * 2 * C * 9 * C * cd       # fused weights (double buffered)
           + 2 * C * HW * res.dtype.itemsize   # residual
           + 2 * C * HW * 4               # f32 output / accumulator
           + 9 * C * HW * cd)             # im2col scratch
    vmem_limit = int(min(max(3 * est, 32 * 1024 * 1024), 64 * 1024 * 1024))

    grid_spec = pltpu.PrefetchScalarGridSpec(
        num_scalar_prefetch=1,
        grid=(T, N, Ao),
        in_specs=[
            # target residual, resident across the reduction axis
            pl.BlockSpec((None, None, C, HW),
                         lambda t, n, j, sel_ref: (t, n, 0, 0)),
            # flattened, row-padded aux map selected via the prefetched table
            pl.BlockSpec((None, None, C, L),
                         lambda t, n, j, sel_ref: (sel_ref[t, j], n, 0, 0)),
            # fused [att ; conv] weights for pair (t, j)
            pl.BlockSpec((None, None, 2 * C, 9 * C),
                         lambda t, n, j, sel_ref: (t, j, 0, 0)),
        ],
        out_specs=pl.BlockSpec((None, None, C, HW),
                               lambda t, n, j, sel_ref: (t, n, 0, 0)),
        scratch_shapes=[pltpu.VMEM((9 * C, HW), compute_dtype)],
    )

    return pl.pallas_call(
        _make_kernel(C, H, W),
        out_shape=jax.ShapeDtypeStruct((T, N, C, HW), jnp.float32),
        grid_spec=grid_spec,
        compiler_params=pltpu.CompilerParams(
            dimension_semantics=("parallel", "parallel", "arbitrary"),
            vmem_limit_bytes=vmem_limit),
    )(sel, res, xflat, wf)


# --------------------------------------------------------------------------
# Python wrapper (layout plumbing only; all compute is in the kernel)
# --------------------------------------------------------------------------
def multi_task_distillation_forward(x, params, tasks, auxilary_tasks,
                                    compute_dtype=jnp.float32):
    """x: dict 'features_<t>' -> NCHW array.  params[t][a] -> {'w_att','w_conv'} OIHW.

    Returns dict t -> NCHW array, matching the PyTorch module's forward.
    compute_dtype=jnp.bfloat16 is recommended on v6e/v7x (f32 accumulation kept).
    """
    aux_list = list(auxilary_tasks)
    aux_pos = {a: i for i, a in enumerate(aux_list)}
    others = {t: [a for a in auxilary_tasks if a != t] for t in tasks}

    ref_feat = x['features_%s' % tasks[0]]
    N, C, H, W = ref_feat.shape
    HW = H * W

    # Row-padded, flattened aux maps (C, L) with L = H*W + 2W + 2 so that every
    # 3x3 tap becomes a constant lane shift inside the kernel.  Stored once.
    def flatten_rowpad(a_nchw):
        xp = jnp.pad(a_nchw, ((0, 0), (0, 0), (1, 1), (0, 0)))  # zero rows above/below
        flat = xp.reshape(N, C, (H + 2) * W)
        return jnp.pad(flat, ((0, 0), (0, 0), (1, 1)))           # -> (N, C, H*W + 2W + 2)

    xflat_all = jnp.stack(
        [flatten_rowpad(x['features_%s' % a]) for a in aux_list]
    ).astype(compute_dtype)                                       # (A, N, C, L)

    def fuse_weights(p):
        # OIHW (C, C, 3, 3) -> (C, 9C) rows=co, cols=(dy*3+dx)*C + cin ;
        # att and conv stacked along the output-channel dim -> (2C, 9C).
        def mat(w_oihw):
            return jnp.transpose(w_oihw, (0, 2, 3, 1)).reshape(C, 9 * C)
        return jnp.concatenate([mat(p['w_att']), mat(p['w_conv'])], axis=0)

    out = {}
    # Group targets by their number of auxiliary sources so each group is one
    # fused pallas_call (uniform for the usual tasks == auxilary_tasks case).
    groups = {}
    for t in tasks:
        groups.setdefault(len(others[t]), []).append(t)

    for Ao, ts in groups.items():
        if Ao == 0:
            for t in ts:
                out[t] = x['features_%s' % t]
            continue
        res = jnp.stack(
            [x['features_%s' % t].reshape(N, C, HW) for t in ts])          # (Tg, N, C, HW)
        sel = jnp.array([[aux_pos[a] for a in others[t]] for t in ts],
                        dtype=jnp.int32)                                    # (Tg, Ao)
        wf = jnp.stack(
            [jnp.stack([fuse_weights(params[t][a]) for a in others[t]])
             for t in ts]).astype(compute_dtype)                            # (Tg, Ao, 2C, 9C)

        y = _fused_distill_call(res, xflat_all, wf, sel, C, H, W, compute_dtype)
        for i, t in enumerate(ts):
            out[t] = y[i].reshape(N, C, H, W).astype(ref_feat.dtype)
    return out


# --------------------------------------------------------------------------
# pure-JAX reference (correctness check only)
# --------------------------------------------------------------------------
def _sablock_ref(x_nchw, w_att_oihw, w_conv_oihw):
    conv = lambda w: lax.conv_general_dilated(
        x_nchw, w, window_strides=(1, 1), padding='SAME',
        dimension_numbers=('NCHW', 'OIHW', 'NCHW'))
    return jax.nn.sigmoid(conv(w_att_oihw)) * conv(w_conv_oihw)


def _module_ref(x, params, tasks, auxilary_tasks):
    out = {}
    for t in tasks:
        acc = x['features_%s' % t]
        for a in auxilary_tasks:
            if a == t:
                continue
            acc = acc + _sablock_ref(x['features_%s' % a],
                                     params[t][a]['w_att'],
                                     params[t][a]['w_conv'])
        out[t] = acc
    return out


if __name__ == "__main__":
    tasks = ['semseg', 'depth', 'normals']
    auxilary_tasks = tasks
    N, C, H, W = 2, 8, 16, 16

    key = jax.random.PRNGKey(0)

    # deterministic synthetic inputs (NCHW, like the PyTorch module receives)
    x = {}
    for t in tasks:
        key, k = jax.random.split(key)
        x['features_%s' % t] = jax.random.normal(k, (N, C, H, W), jnp.float32)

    # deterministic synthetic SABlock parameters (PyTorch OIHW conv weights, no bias)
    params = {}
    scale = 1.0 / math.sqrt(C * 3 * 3)
    for t in tasks:
        params[t] = {}
        for a in auxilary_tasks:
            if a == t:
                continue
            key, k1, k2 = jax.random.split(key, 3)
            params[t][a] = {
                'w_att': scale * jax.random.normal(k1, (C, C, 3, 3), jnp.float32),
                'w_conv': scale * jax.random.normal(k2, (C, C, 3, 3), jnp.float32),
            }

    ref = _module_ref(x, params, tasks, auxilary_tasks)

    # f32 compute path (matches the reference tightly)
    out = multi_task_distillation_forward(x, params, tasks, auxilary_tasks)
    out = {t: jax.block_until_ready(v) for t, v in out.items()}
    for t in tasks:
        assert out[t].shape == (N, C, H, W)
        assert jnp.allclose(out[t], ref[t], atol=1e-3, rtol=1e-3), f"mismatch for task {t}"

    # bf16 compute path (recommended on v6e/v7x): bf16 matmul inputs, f32 accumulation
    out_bf16 = multi_task_distillation_forward(x, params, tasks, auxilary_tasks,
                                               compute_dtype=jnp.bfloat16)
    out_bf16 = {t: jax.block_until_ready(v) for t, v in out_bf16.items()}
    for t in tasks:
        assert jnp.allclose(out_bf16[t], ref[t], atol=1e-1, rtol=1e-1), \
            f"bf16 mismatch for task {t}"

    print("KERNEL_OK")
</pallas_src>

<mosaic_0001>
module attributes {stable_mosaic.version = 11 : i64} {
  func.func @kernel(%arg0: i32, %arg1: i32, %arg2: i32, %arg3: memref<3x2xi32, #tpu.memory_space<smem>>, %arg4: memref<1x1x8x256xf32, #tpu.memory_space<vmem>>, %arg5: memref<1x1x8x290xf32, #tpu.memory_space<vmem>>, %arg6: memref<1x1x16x72xf32, #tpu.memory_space<vmem>>, %arg7: memref<1x1x8x256xf32, #tpu.memory_space<vmem>>, %arg8: memref<72x256xf32, #tpu.memory_space<vmem>>) attributes {dimension_semantics = [#tpu.dimension_semantics<parallel>, #tpu.dimension_semantics<parallel>, #tpu.dimension_semantics<arbitrary>], iteration_bounds = array<i64: 3, 2, 2>, scalar_prefetch = 1 : i64, scratch_operands = 1 : i64, tpu.core_type = #tpu.core_type<tc>, window_params = [{transform_indices = @transform_0, window_bounds = array<i64: 1, 1, 8, 256>}, {transform_indices = @transform_1, window_bounds = array<i64: 1, 1, 8, 290>}, {transform_indices = @transform_2, window_bounds = array<i64: 1, 1, 16, 72>}, {transform_indices = @transform_3, window_bounds = array<i64: 1, 1, 8, 256>}]} {
    %c0_i32 = arith.constant 0 : i32
    %0 = arith.cmpi eq, %arg2, %c0_i32 : i32
    %1 = arith.extui %0 : i1 to i32
    %c0_i32_0 = arith.constant 0 : i32
    %2 = arith.cmpi ne, %1, %c0_i32_0 : i32
    scf.if %2 {
      %c0_40 = arith.constant 0 : index
      %c0_41 = arith.constant 0 : index
      %c0_42 = arith.constant 0 : index
      %c0_43 = arith.constant 0 : index
      %74 = vector.load %arg4[%c0_40, %c0_41, %c0_42, %c0_43] : memref<1x1x8x256xf32, #tpu.memory_space<vmem>>, vector<1x1x8x256xf32>
      %75 = vector.shape_cast %74 : vector<1x1x8x256xf32> to vector<8x256xf32>
      %c0_44 = arith.constant 0 : index
      %c0_45 = arith.constant 0 : index
      %c0_46 = arith.constant 0 : index
      %c0_47 = arith.constant 0 : index
      %76 = vector.load %arg7[%c0_44, %c0_45, %c0_46, %c0_47] : memref<1x1x8x256xf32, #tpu.memory_space<vmem>>, vector<1x1x8x256xf32>
      %77 = vector.shape_cast %76 : vector<1x1x8x256xf32> to vector<8x256xf32>
      %78 = vector.shape_cast %75 : vector<8x256xf32> to vector<1x1x8x256xf32>
      tpu.vector_store %arg7[%c0_44, %c0_45, %c0_46, %c0_47], %78 {strides = array<i32>} : memref<1x1x8x256xf32, #tpu.memory_space<vmem>>, vector<1x1x8x256xf32>,
    } else {
    }
    %3 = tpu.iota {dimensions = array<i32: 1>} : vector<8x256xi32>
    %c16_i32 = arith.constant 16 : i32
    %c0_i32_1 = arith.constant 0 : i32
    %4 = arith.cmpi eq, %c16_i32, %c0_i32_1 : i32
    %c1_i32 = arith.constant 1 : i32
    %5 = arith.select %4, %c1_i32, %c16_i32 : i32
    %6 = vector.broadcast %5 : i32 to vector<8x256xi32>
    %7 = arith.remsi %3, %6 : vector<8x256xi32>
    %c0_i32_2 = arith.constant 0 : i32
    %8 = vector.broadcast %c0_i32_2 : i32 to vector<8x256xi32>
    %9 = arith.cmpi ne, %7, %8 : vector<8x256xi32>
    %c0_i32_3 = arith.constant 0 : i32
    %10 = vector.broadcast %c0_i32_3 : i32 to vector<8x256xi32>
    %11 = arith.cmpi slt, %7, %10 : vector<8x256xi32>
    %c0_i32_4 = arith.constant 0 : i32
    %12 = arith.cmpi slt, %5, %c0_i32_4 : i32
    %13 = vector.broadcast %12 : i1 to vector<8x256xi1>
    %14 = vector.broadcast %13 : vector<8x256xi1> to vector<8x256xi1>
    %15 = arith.xori %11, %14 : vector<8x256xi1>
    %16 = arith.andi %15, %9 : vector<8x256xi1>
    %17 = vector.broadcast %5 : i32 to vector<8x256xi32>
    %18 = arith.addi %7, %17 : vector<8x256xi32>
    %19 = arith.select %16, %18, %7 : vector<8x256xi1>, vector<8x256xi32>
    %c0_i32_5 = arith.constant 0 : i32
    %20 = vector.broadcast %c0_i32_5 : i32 to vector<8x256xi32>
    %21 = arith.cmpi ne, %19, %20 : vector<8x256xi32>
    %c15_i32 = arith.constant 15 : i32
    %22 = vector.broadcast %c15_i32 : i32 to vector<8x256xi32>
    %23 = arith.cmpi ne, %19, %22 : vector<8x256xi32>
    %c0 = arith.constant 0 : index
    %c0_6 = arith.constant 0 : index
    %c0_7 = arith.constant 0 : index
    %c0_8 = arith.constant 0 : index
    %24 = vector.load %arg5[%c0, %c0_6, %c0_7, %c0_8] : memref<1x1x8x290xf32, #tpu.memory_space<vmem>>, vector<1x1x8x290xf32>
    %25 = vector.shape_cast %24 : vector<1x1x8x290xf32> to vector<8x290xf32>
    %26 = vector.extract_strided_slice %25 {offsets = [0, 0], sizes = [8, 256], strides = [1, 1]} : vector<8x290xf32> to vector<8x256xf32>
    %cst = arith.constant 0.000000e+00 : f32
    %27 = vector.broadcast %cst : f32 to vector<8x256xf32>
    %28 = arith.select %21, %26, %27 : vector<8x256xi1>, vector<8x256xf32>
    %c0_9 = arith.constant 0 : index
    %c0_10 = arith.constant 0 : index
    %29 = vector.load %arg8[%c0_9, %c0_10] : memref<72x256xf32, #tpu.memory_space<vmem>>, vector<8x256xf32>
    tpu.vector_store %arg8[%c0_9, %c0_10], %28 {strides = array<i32>} : memref<72x256xf32, #tpu.memory_space<vmem>>, vector<8x256xf32>,
    %30 = vector.extract_strided_slice %25 {offsets = [0, 1], sizes = [8, 256], strides = [1, 1]} : vector<8x290xf32> to vector<8x256xf32>
    %c8 = arith.constant 8 : index
    %c0_11 = arith.constant 0 : index
    %31 = vector.load %arg8[%c8, %c0_11] : memref<72x256xf32, #tpu.memory_space<vmem>>, vector<8x256xf32>
    tpu.vector_store %arg8[%c8, %c0_11], %30 {strides = array<i32>} : memref<72x256xf32, #tpu.memory_space<vmem>>, vector<8x256xf32>,
    %32 = vector.extract_strided_slice %25 {offsets = [0, 2], sizes = [8, 256], strides = [1, 1]} : vector<8x290xf32> to vector<8x256xf32>
    %cst_12 = arith.constant 0.000000e+00 : f32
    %33 = vector.broadcast %cst_12 : f32 to vector<8x256xf32>
    %34 = arith.select %23, %32, %33 : vector<8x256xi1>, vector<8x256xf32>
    %c16 = arith.constant 16 : index
    %c0_13 = arith.constant 0 : index
    %35 = vector.load %arg8[%c16, %c0_13] : memref<72x256xf32, #tpu.memory_space<vmem>>, vector<8x256xf32>
    tpu.vector_store %arg8[%c16, %c0_13], %34 {strides = array<i32>} : memref<72x256xf32, #tpu.memory_space<vmem>>, vector<8x256xf32>,
    %36 = vector.extract_strided_slice %25 {offsets = [0, 16], sizes = [8, 256], strides = [1, 1]} : vector<8x290xf32> to vector<8x256xf32>
    %cst_14 = arith.constant 0.000000e+00 : f32
    %37 = vector.broadcast %cst_14 : f32 to vector<8x256xf32>
    %38 = arith.select %21, %36, %37 : vector<8x256xi1>, vector<8x256xf32>
    %c24 = arith.constant 24 : index
    %c0_15 = arith.constant 0 : index
    %39 = vector.load %arg8[%c24, %c0_15] : memref<72x256xf32, #tpu.memory_space<vmem>>, vector<8x256xf32>
    tpu.vector_store %arg8[%c24, %c0_15], %38 {strides = array<i32>} : memref<72x256xf32, #tpu.memory_space<vmem>>, vector<8x256xf32>,
    %40 = vector.extract_strided_slice %25 {offsets = [0, 17], sizes = [8, 256], strides = [1, 1]} : vector<8x290xf32> to vector<8x256xf32>
    %c32 = arith.constant 32 : index
    %c0_16 = arith.constant 0 : index
    %41 = vector.load %arg8[%c32, %c0_16] : memref<72x256xf32, #tpu.memory_space<vmem>>, vector<8x256xf32>
    tpu.vector_store %arg8[%c32, %c0_16], %40 {strides = array<i32>} : memref<72x256xf32, #tpu.memory_space<vmem>>, vector<8x256xf32>,
    %42 = vector.extract_strided_slice %25 {offsets = [0, 18], sizes = [8, 256], strides = [1, 1]} : vector<8x290xf32> to vector<8x256xf32>
    %cst_17 = arith.constant 0.000000e+00 : f32
    %43 = vector.broadcast %cst_17 : f32 to vector<8x256xf32>
    %44 = arith.select %23, %42, %43 : vector<8x256xi1>, vector<8x256xf32>
    %c40 = arith.constant 40 : index
    %c0_18 = arith.constant 0 : index
    %45 = vector.load %arg8[%c40, %c0_18] : memref<72x256xf32, #tpu.memory_space<vmem>>, vector<8x256xf32>
    tpu.vector_store %arg8[%c40, %c0_18], %44 {strides = array<i32>} : memref<72x256xf32, #tpu.memory_space<vmem>>, vector<8x256xf32>,
    %46 = vector.extract_strided_slice %25 {offsets = [0, 32], sizes = [8, 256], strides = [1, 1]} : vector<8x290xf32> to vector<8x256xf32>
    %cst_19 = arith.constant 0.000000e+00 : f32
    %47 = vector.broadcast %cst_19 : f32 to vector<8x256xf32>
    %48 = arith.select %21, %46, %47 : vector<8x256xi1>, vector<8x256xf32>
    %c48 = arith.constant 48 : index
    %c0_20 = arith.constant 0 : index
    %49 = vector.load %arg8[%c48, %c0_20] : memref<72x256xf32, #tpu.memory_space<vmem>>, vector<8x256xf32>
    tpu.vector_store %arg8[%c48, %c0_20], %48 {strides = array<i32>} : memref<72x256xf32, #tpu.memory_space<vmem>>, vector<8x256xf32>,
    %50 = vector.extract_strided_slice %25 {offsets = [0, 33], sizes = [8, 256], strides = [1, 1]} : vector<8x290xf32> to vector<8x256xf32>
    %c56 = arith.constant 56 : index
    %c0_21 = arith.constant 0 : index
    %51 = vector.load %arg8[%c56, %c0_21] : memref<72x256xf32, #tpu.memory_space<vmem>>, vector<8x256xf32>
    tpu.vector_store %arg8[%c56, %c0_21], %50 {strides = array<i32>} : memref<72x256xf32, #tpu.memory_space<vmem>>, vector<8x256xf32>,
    %52 = vector.extract_strided_slice %25 {offsets = [0, 34], sizes = [8, 256], strides = [1, 1]} : vector<8x290xf32> to vector<8x256xf32>
    %cst_22 = arith.constant 0.000000e+00 : f32
    %53 = vector.broadcast %cst_22 : f32 to vector<8x256xf32>
    %54 = arith.select %23, %52, %53 : vector<8x256xi1>, vector<8x256xf32>
    %c64 = arith.constant 64 : index
    %c0_23 = arith.constant 0 : index
    %55 = vector.load %arg8[%c64, %c0_23] : memref<72x256xf32, #tpu.memory_space<vmem>>, vector<8x256xf32>
    tpu.vector_store %arg8[%c64, %c0_23], %54 {strides = array<i32>} : memref<72x256xf32, #tpu.memory_space<vmem>>, vector<8x256xf32>,
    %c0_24 = arith.constant 0 : index
    %c0_25 = arith.constant 0 : index
    %c0_26 = arith.constant 0 : index
    %c0_27 = arith.constant 0 : index
    %56 = vector.load %arg6[%c0_24, %c0_25, %c0_26, %c0_27] : memref<1x1x16x72xf32, #tpu.memory_space<vmem>>, vector<1x1x16x72xf32>
    %57 = vector.shape_cast %56 : vector<1x1x16x72xf32> to vector<16x72xf32>
    %c0_28 = arith.constant 0 : index
    %c0_29 = arith.constant 0 : index
    %58 = vector.load %arg8[%c0_28, %c0_29] : memref<72x256xf32, #tpu.memory_space<vmem>>, vector<72x256xf32>
    %cst_30 = arith.constant dense<0.000000e+00> : vector<16x256xf32>
    %59 = tpu.matmul %57, %58, %cst_30 {dimension_numbers = #tpu.dot_dimension_numbers<[1], [0], [0], [1], [0, 0, 1, 1], [], []>} : vector<16x72xf32>, vector<72x256xf32>, vector<16x256xf32> -> vector<16x256xf32>
    %c0_31 = arith.constant 0 : index
    %c0_32 = arith.constant 0 : index
    %c0_33 = arith.constant 0 : index
    %c0_34 = arith.constant 0 : index
    %60 = vector.load %arg7[%c0_31, %c0_32, %c0_33, %c0_34] : memref<1x1x8x256xf32, #tpu.memory_space<vmem>>, vector<1x1x8x256xf32>
    %61 = vector.shape_cast %60 : vector<1x1x8x256xf32> to vector<8x256xf32>
    %62 = vector.extract_strided_slice %59 {offsets = [0, 0], sizes = [8, 256], strides = [1, 1]} : vector<16x256xf32> to vector<8x256xf32>
    %63 = arith.negf %62 : vector<8x256xf32>
    %64 = math.exp %63 : vector<8x256xf32>
    %cst_35 = arith.constant 1.000000e+00 : f32
    %65 = vector.broadcast %cst_35 : f32 to vector<8x256xf32>
    %66 = arith.addf %65, %64 : vector<8x256xf32>
    %67 = arith.divf %65, %66 : vector<8x256xf32>
    %68 = vector.extract_strided_slice %59 {offsets = [8, 0], sizes = [8, 256], strides = [1, 1]} : vector<16x256xf32> to vector<8x256xf32>
    %69 = arith.mulf %67, %68 : vector<8x256xf32>
    %70 = arith.addf %61, %69 : vector<8x256xf32>
    %c0_36 = arith.constant 0 : index
    %c0_37 = arith.constant 0 : index
    %c0_38 = arith.constant 0 : index
    %c0_39 = arith.constant 0 : index
    %71 = vector.load %arg7[%c0_36, %c0_37, %c0_38, %c0_39] : memref<1x1x8x256xf32, #tpu.memory_space<vmem>>, vector<1x1x8x256xf32>
    %72 = vector.shape_cast %71 : vector<1x1x8x256xf32> to vector<8x256xf32>
    %73 = vector.shape_cast %70 : vector<8x256xf32> to vector<1x1x8x256xf32>
    tpu.vector_store %arg7[%c0_36, %c0_37, %c0_38, %c0_39], %73 {strides = array<i32>} : memref<1x1x8x256xf32, #tpu.memory_space<vmem>>, vector<1x1x8x256xf32>,
    return
  }
  func.func @transform_0(%arg0: i32, %arg1: i32, %arg2: i32, %arg3: memref<3x2xi32, #tpu.memory_space<smem>>) -> (i32, i32, i32, i32) {
    %c0_i32 = arith.constant 0 : i32
    %c0_i32_0 = arith.constant 0 : i32
    %c0_i32_1 = arith.constant 0 : i32
    return %arg0, %arg1, %c0_i32, %c0_i32_0 : i32, i32, i32, i32
  }
  func.func @transform_1(%arg0: i32, %arg1: i32, %arg2: i32, %arg3: memref<3x2xi32, #tpu.memory_space<smem>>) -> (i32, i32, i32, i32) {
    %0 = arith.index_cast %arg0 : i32 to index
    %1 = arith.index_cast %arg2 : i32 to index
    %2 = memref.load %arg3[%0, %1] : memref<3x2xi32, #tpu.memory_space<smem>>
    %c0_i32 = arith.constant 0 : i32
    %c0_i32_0 = arith.constant 0 : i32
    %c0_i32_1 = arith.constant 0 : i32
    return %2, %arg1, %c0_i32, %c0_i32_0 : i32, i32, i32, i32
  }
  func.func @transform_2(%arg0: i32, %arg1: i32, %arg2: i32, %arg3: memref<3x2xi32, #tpu.memory_space<smem>>) -> (i32, i32, i32, i32) {
    %c0_i32 = arith.constant 0 : i32
    %c0_i32_0 = arith.constant 0 : i32
    %c0_i32_1 = arith.constant 0 : i32
    return %arg0, %arg2, %c0_i32, %c0_i32_0 : i32, i32, i32, i32
  }
  func.func @transform_3(%arg0: i32, %arg1: i32, %arg2: i32, %arg3: memref<3x2xi32, #tpu.memory_space<smem>>) -> (i32, i32, i32, i32) {
    %c0_i32 = arith.constant 0 : i32
    %c0_i32_0 = arith.constant 0 : i32
    %c0_i32_1 = arith.constant 0 : i32
    return %arg0, %arg1, %c0_i32, %c0_i32_0 : i32, i32, i32, i32
  }
}

</mosaic_0001>

<llo_original>
// kernel: tpu_custom_call.1
$region0: #{tpu_custom_call.1}
  #allocation0 [shape = 'u32[]', space=smem, size = 0x4, offset = 0x4, fixed_abs, tag = 'smem constant byte address 0x4 - core index']
  #allocation1 [shape = 'u32[72,128]{1,0:T(1,128)}', space=vmem, size = 0x9000, scoped, tag = 'internal scratch']
  #allocation2 [shape = 'f32[72,256]{1,0:T(8,128)}', space=vmem, size = 0x12000, scoped, tag = 'scratch operand']
  #allocation3 [shape = 's32[1]{0}', space=sflag, size = 0x4, scoped, tag = 'scoped memory for tpu_custom_call.1']
  #allocation4 [shape = 'u8[2048]{0}', space=smem, size = 0x800, scoped, tag = 'prefetched SMEM operand 0']
  %s0 = inlined_call_operand.vmem [shape: s32[3,2], index: 0, kind: input, shape index: {}]
  %s1 = inlined_call_operand.hbm [shape: f32[3,2,8,256], index: 1, kind: input, shape index: {}]
  %s2 = inlined_call_operand.hbm [shape: f32[3,2,8,290], index: 2, kind: input, shape index: {}]
  %s3 = inlined_call_operand.hbm [shape: f32[3,2,16,72], index: 3, kind: input, shape index: {}]
  %s4 = inlined_call_operand.hbm [shape: f32[3,2,8,256], index: 4, kind: output, shape index: {}]
  %s5 = sld [smem:[#allocation0]]
  $region61: #{tpu_custom_call.1} parent=0
    _
  %s7 = ssub.s32 1, %s5
  %s8 = scalar_select 0, %s7, %s5
  %s10 = sshll.u32 %s0, 4
  %s11 = int_to_ptr.vmem [resolvable:$true] %s10
  %13 = dma.vmem_to_smem %s11, 64, [#allocation4], [#allocation3]
  %15 = dma.done [#allocation3], 64
  %16 = sfence
  $region1: #{tpu_custom_call.1} parent=0
    #allocation5 [shape = 'u8[16384]{0}', space=vmem, size = 0x4000, scoped, tag = 'input window, operand 1']
    #allocation6 [shape = 's32[2]{0}', space=sflag, size = 0x8, scoped, tag = 'scoped memory for tpu_custom_call.1']
    #allocation7 [shape = 's32[2]{0}', space=sflag, size = 0x8, scoped, tag = 'scoped memory for tpu_custom_call.1']
    #allocation8 [shape = 'u8[24576]{0}', space=vmem, size = 0x6000, scoped, tag = 'input window, operand 2']
    #allocation9 [shape = 's32[2]{0}', space=sflag, size = 0x8, scoped, tag = 'scoped memory for tpu_custom_call.1']
    #allocation10 [shape = 'u8[16384]{0}', space=vmem, size = 0x4000, scoped, tag = 'input window, operand 3']
    #allocation11 [shape = 'u8[16384]{0}', space=vmem, size = 0x4000, scoped, tag = 'output window, operand 0']
    %17 = vsyncpa [#allocation6], 0
    %s18 = scalar_lea.sflag [#allocation6], 1
    %19 = vsyncpa %s18, 0
    %20 = vsyncpa [#allocation9], 0
    %s21 = scalar_lea.sflag [#allocation9], 1
    %22 = vsyncpa %s21, 0
    %23 = vsyncpa [#allocation7], 0
    %s24 = scalar_lea.sflag [#allocation7], 1
    %25 = vsyncpa %s24, 0
    loop: start=0, step=1, limit=14
    $region2: #{tpu_custom_call.1} parent=1 // loop_pre_header
      _
    $region3: #{tpu_custom_call.1} parent=1 // loop_header
      %s27 = sphi 0, %s31
      %p28 = scmp.ge.s32.totalorder %s27, 14
      %s34 = sphi 0, %s53
      %s35 = sphi 0, %s49
      %s36 = sphi 0, %s45
      %s37 = sphi 0, %s34
      %s38 = sphi 0, %s35
      %s39 = sphi 0, %s36
      %s40 = sphi 0, %s37
      %s41 = sphi 0, %s38
      %s42 = sphi 0, %s39
      %s58 = sphi 0, %s60
      %s61 = sphi 0, %s58
      %s62 = sphi 0, %s61
      %s78 = sphi 0, %s62
      %s102 = sphi 0, %s104
      %s105 = sphi 0, %s102
      %s106 = sphi 0, %s105
      %s122 = sphi 0, %s106
      %s130 = sphi 0, %s132
      %s133 = sphi 0, %s130
      %s134 = sphi 0, %s133
      %s150 = sphi 0, %s134
      %s158 = sphi 0, %s160
      %s161 = sphi 0, %s158
      %s162 = sphi 0, %s161
      %s178 = sphi 0, %s162
    $region4: #{tpu_custom_call.1} parent=1 // loop_header_branch
      %30 = sbr.rel (%p28) target = $region8
    $region5: #{tpu_custom_call.1} parent=1 // loop_body
      %s32 = ssub.s32 %s27, 1
      %s33 = ssub.s32 %s27, 2
      %s43 = sadd.s32 1, %s36
      %p44 = scmp.ge.s32.totalorder %s43, 2
      %s45 = scalar_select %p44, 0, %s43
      %s46 = sadd.s32 1, %s35
      %s47 = scalar_select %p44, %s46, %s35
      %p48 = scmp.ge.s32.totalorder %s47, 2
      %s49 = scalar_select %p48, 0, %s47
      %s50 = sadd.s32 1, %s34
      %s51 = scalar_select %p48, %s50, %s34
      %p52 = scmp.ge.s32.totalorder %s51, 3
      %s53 = scalar_select %p52, 0, %s51
      %s54 = ssub.s32 %s34, %s53
      %s55 = ssub.s32 %s35, %s49
      %s56 = sor.u32 %s54, %s55
      %p57 = scmp.eq.s32.totalorder %s56, 0
      %s59 = sadd.s32 %s58, 1
      %s60 = scalar_select %p57, %s58, %s59
      %p63 = pneg %p57
      %p64 = scmp.eq.s32.totalorder %s27, 11
      %p65 = por %p63, %p64
      %p66 = scmp.ne.s32.totalorder %s58, %s61
      %p67 = scmp.eq.s32.totalorder %s27, 0
      %p68 = por %p66, %p67
      %p69 = scmp.ne.s32.totalorder %s58, %s61
      %p70 = scmp.eq.s32.totalorder %s32, 11
      %p71 = por %p69, %p70
      %p72 = scmp.ne.s32.totalorder %s61, %s62
      %p73 = scmp.eq.s32.totalorder %s32, 0
      %p74 = por %p72, %p73
      %p75 = scmp.ne.s32.totalorder %s61, %s62
      %p76 = scmp.eq.s32.totalorder %s33, 11
      %p77 = por %p75, %p76
      %p79 = scmp.ne.s32.totalorder %s62, %s78
      %p80 = scmp.eq.s32.totalorder %s33, 0
      %p81 = por %p79, %p80
      %s82 = sshra.s32 %s36, 7
      %s83 = sand.u32 %s36, 127
      %s84 = sadd.s32 %s82, %s34
      %s85 = smul.u32 %s84, 128
      %s86 = sshra.s32 %s36, 7
      %s87 = sand.u32 %s36, 127
      %s88 = sadd.s32 %s85, %s87
      %s89 = sld [smem:[#allocation4 + %s88]]
      %s90 = sshra.s32 %s45, 7
      %s91 = sand.u32 %s45, 127
      %s92 = sadd.s32 %s90, %s53
      %s93 = smul.u32 %s92, 128
      %s94 = sshra.s32 %s45, 7
      %s95 = sand.u32 %s45, 127
      %s96 = sadd.s32 %s93, %s95
      %s97 = sld [smem:[#allocation4 + %s96]]
      %s98 = ssub.s32 %s89, %s97
      %s99 = ssub.s32 %s35, %s49
      %s100 = sor.u32 %s98, %s99
      %p101 = scmp.eq.s32.totalorder %s100, 0
      %s103 = sadd.s32 %s102, 1
      %s104 = scalar_select %p101, %s102, %s103
      %p107 = pneg %p101
      %p108 = scmp.eq.s32.totalorder %s27, 11
      %p109 = por %p107, %p108
      %p110 = scmp.ne.s32.totalorder %s102, %s105
      %p111 = scmp.eq.s32.totalorder %s27, 0
      %p112 = por %p110, %p111
      %p113 = scmp.ne.s32.totalorder %s102, %s105
      %p114 = scmp.eq.s32.totalorder %s32, 11
      %p115 = por %p113, %p114
      %p116 = scmp.ne.s32.totalorder %s105, %s106
      %p117 = scmp.eq.s32.totalorder %s32, 0
      %p118 = por %p116, %p117
      %p119 = scmp.ne.s32.totalorder %s105, %s106
      %p120 = scmp.eq.s32.totalorder %s33, 11
      %p121 = por %p119, %p120
      %p123 = scmp.ne.s32.totalorder %s106, %s122
      %p124 = scmp.eq.s32.totalorder %s33, 0
      %p125 = por %p123, %p124
      %s126 = ssub.s32 %s34, %s53
      %s127 = ssub.s32 %s36, %s45
      %s128 = sor.u32 %s126, %s127
      %p129 = scmp.eq.s32.totalorder %s128, 0
      %s131 = sadd.s32 %s130, 1
      %s132 = scalar_select %p129, %s130, %s131
      %p135 = pneg %p129
      %p136 = scmp.eq.s32.totalorder %s27, 11
      %p137 = por %p135, %p136
      %p138 = scmp.ne.s32.totalorder %s130, %s133
      %p139 = scmp.eq.s32.totalorder %s27, 0
      %p140 = por %p138, %p139
      %p141 = scmp.ne.s32.totalorder %s130, %s133
      %p142 = scmp.eq.s32.totalorder %s32, 11
      %p143 = por %p141, %p142
      %p144 = scmp.ne.s32.totalorder %s133, %s134
      %p145 = scmp.eq.s32.totalorder %s32, 0
      %p146 = por %p144, %p145
      %p147 = scmp.ne.s32.totalorder %s133, %s134
      %p148 = scmp.eq.s32.totalorder %s33, 11
      %p149 = por %p147, %p148
      %p151 = scmp.ne.s32.totalorder %s134, %s150
      %p152 = scmp.eq.s32.totalorder %s33, 0
      %p153 = por %p151, %p152
      %s154 = ssub.s32 %s34, %s53
      %s155 = ssub.s32 %s35, %s49
      %s156 = sor.u32 %s154, %s155
      %p157 = scmp.eq.s32.totalorder %s156, 0
      %s159 = sadd.s32 %s158, 1
      %s160 = scalar_select %p157, %s158, %s159
      %p163 = pneg %p157
      %p164 = scmp.eq.s32.totalorder %s27, 11
      %p165 = por %p163, %p164
      %p166 = scmp.ne.s32.totalorder %s158, %s161
      %p167 = scmp.eq.s32.totalorder %s27, 0
      %p168 = por %p166, %p167
      %p169 = scmp.ne.s32.totalorder %s158, %s161
      %p170 = scmp.eq.s32.totalorder %s32, 11
      %p171 = por %p169, %p170
      %p172 = scmp.ne.s32.totalorder %s161, %s162
      %p173 = scmp.eq.s32.totalorder %s32, 0
      %p174 = por %p172, %p173
      %p175 = scmp.ne.s32.totalorder %s161, %s162
      %p176 = scmp.eq.s32.totalorder %s33, 11
      %p177 = por %p175, %p176
      %p179 = scmp.ne.s32.totalorder %s162, %s178
      %p180 = scmp.eq.s32.totalorder %s33, 0
      %p181 = por %p179, %p180
      %p182 = scmp.le.s32.totalorder 1, %s27
      %p183 = scmp.lt.s32.totalorder %s27, 13
      %p184 = pnand %p182, %p183
      %p185 = pneg %p184
      // Predicated region
      $region9: #{tpu_custom_call.1} parent=5 // pred_check
        _
      $region10: #{tpu_custom_call.1} parent=5 // pred_check_branch
        %187 = sbr.rel (%p184) target = $region12
      $region11: #{tpu_custom_call.1} parent=5 // pred_region
        %s188 = ssub.s32 %s27, 1
      $region12: #{tpu_custom_call.1} parent=5 // pred_fallthru
        _
      %p189 = scmp.lt.s32.totalorder %s27, 12
      // Predicated region
      $region13: #{tpu_custom_call.1} parent=5 // pred_check
        %p190 = pneg %p189
      $region14: #{tpu_custom_call.1} parent=5 // pred_check_branch
        %192 = sbr.rel (%p190) target = $region16
      $region15: #{tpu_custom_call.1} parent=5 // pred_region
        // Predicated region
        $region17: #{tpu_custom_call.1} parent=15 // pred_check
          %p193 = pneg %p68
        $region18: #{tpu_custom_call.1} parent=15 // pred_check_branch
          %195 = sbr.rel (%p193) target = $region20
        $region19: #{tpu_custom_call.1} parent=15 // pred_region
          %s196 = sand.u32 %s58, 1
          %s197 = scalar_lea.sflag [#allocation6], %s196
          %s198 = sand.u32 %s58, 1
          %s199 = smul.addr %s198, 16
          %s200 = scalar_lea.vmem [#allocation5], %s199
          %202 = vsyncadd %s197, 0
          %s203 = smul.addr %s35, 2
          %s204 = smul.addr %s34, 4
          %s205 = sadd.s32 %s203, %s204
          %s206 = smul.addr %s205, 8
          %s207 = scalar_lea.hbm %s1, %s206
          %s209 = sshll.u32 %s207, 4
          %s210 = int_to_ptr.hbm [resolvable:$true] %s209
          %s211 = sshll.u32 %s200, 4
          %s212 = int_to_ptr.vmem [resolvable:$true] %s211
          %214 = dma.hbm_to_vmem [thread:$0]  %s210, 256, %s212, %s197
        $region20: #{tpu_custom_call.1} parent=15 // pred_fallthru
          _
        // Predicated region
        $region21: #{tpu_custom_call.1} parent=15 // pred_check
          %p215 = pneg %p112
        $region22: #{tpu_custom_call.1} parent=15 // pred_check_branch
          %217 = sbr.rel (%p215) target = $region24
        $region23: #{tpu_custom_call.1} parent=15 // pred_region
          %s218 = sand.u32 %s27, 1
          %s219 = scalar_lea.sflag [#allocation9], %s218
          %s220 = sand.u32 %s102, 1
          %s221 = smul.addr %s220, 24
          %s222 = scalar_lea.vmem [#allocation8], %s221
          %s223 = sshra.s32 %s36, 7
          %s224 = sand.u32 %s36, 127
          %s225 = sadd.s32 %s223, %s34
          %s226 = smul.u32 %s225, 128
          %s227 = sshra.s32 %s36, 7
          %s228 = sand.u32 %s36, 127
          %s229 = sadd.s32 %s226, %s228
          %s230 = sld [smem:[#allocation4 + %s229]]
          %232 = vsyncadd %s219, 0
          %s233 = smul.addr %s35, 3
          %s234 = smul.addr %s230, 6
          %s235 = sadd.s32 %s233, %s234
          %s236 = smul.addr %s235, 8
          %s237 = scalar_lea.hbm %s2, %s236
          %s239 = sshll.u32 %s237, 4
          %s240 = int_to_ptr.hbm [resolvable:$true] %s239
          %s241 = sshll.u32 %s222, 4
          %s242 = int_to_ptr.vmem [resolvable:$true] %s241
          %244 = dma.hbm_to_vmem [thread:$0]  %s240, 384, %s242, %s219
        $region24: #{tpu_custom_call.1} parent=15 // pred_fallthru
          _
        // Predicated region
        $region25: #{tpu_custom_call.1} parent=15 // pred_check
          %p245 = pneg %p140
        $region26: #{tpu_custom_call.1} parent=15 // pred_check_branch
          %247 = sbr.rel (%p245) target = $region28
        $region27: #{tpu_custom_call.1} parent=15 // pred_region
          %s248 = sand.u32 %s27, 1
          %s249 = scalar_lea.sflag [#allocation9], %s248
          %s250 = sand.u32 %s130, 1
          %s251 = smul.addr %s250, 16
          %s252 = scalar_lea.vmem [#allocation10], %s251
          %254 = vsyncadd %s249, 0
          %s255 = smul.addr %s36, 2
          %s256 = smul.addr %s34, 4
          %s257 = sadd.s32 %s255, %s256
          %s258 = smul.addr %s257, 8
          %s259 = scalar_lea.hbm %s3, %s258
          %s260 = sshll.u32 %s259, 4
          %s261 = int_to_ptr.hbm [resolvable:$true] %s260
          %s262 = sshll.u32 %s252, 4
          %s263 = int_to_ptr.vmem [resolvable:$true] %s262
          %268 = dma.hbm_to_vmem [thread:$0]  %s261, 256, %s263, %s249, 128, 128, 8
        $region28: #{tpu_custom_call.1} parent=15 // pred_fallthru
          _
      $region16: #{tpu_custom_call.1} parent=5 // pred_fallthru
        _
      %p269 = scmp.le.s32.totalorder 1, %s27
      %p270 = scmp.lt.s32.totalorder %s27, 13
      %p271 = pnand %p269, %p270
      %p272 = pneg %p271
      // Predicated region
      $region29: #{tpu_custom_call.1} parent=5 // pred_check
        _
      $region30: #{tpu_custom_call.1} parent=5 // pred_check_branch
        %274 = sbr.rel (%p271) target = $region32
      $region31: #{tpu_custom_call.1} parent=5 // pred_region
        %s275 = ssub.s32 %s27, 1
        %s276 = sand.u32 %s61, 1
        %s277 = scalar_lea.sflag [#allocation6], %s276
        %s278 = sand.u32 %s61, 1
        %s279 = smul.addr %s278, 16
        %s280 = scalar_lea.vmem [#allocation5], %s279
        // Predicated region
        $region33: #{tpu_custom_call.1} parent=31 // pred_check
          %p281 = pneg %p74
        $region34: #{tpu_custom_call.1} parent=31 // pred_check_branch
          %283 = sbr.rel (%p281) target = $region36
        $region35: #{tpu_custom_call.1} parent=31 // pred_region
          %285 = dma.done %s277, 256
        $region36: #{tpu_custom_call.1} parent=31 // pred_fallthru
          _
        %s286 = sand.u32 %s32, 1
        %s287 = scalar_lea.sflag [#allocation9], %s286
        %s288 = sand.u32 %s105, 1
        %s289 = smul.addr %s288, 24
        %s290 = scalar_lea.vmem [#allocation8], %s289
        // Predicated region
        $region37: #{tpu_custom_call.1} parent=31 // pred_check
          %p291 = pneg %p118
        $region38: #{tpu_custom_call.1} parent=31 // pred_check_branch
          %293 = sbr.rel (%p291) target = $region40
        $region39: #{tpu_custom_call.1} parent=31 // pred_region
          %295 = dma.done %s287, 384
        $region40: #{tpu_custom_call.1} parent=31 // pred_fallthru
          _
        %s296 = sand.u32 %s32, 1
        %s297 = scalar_lea.sflag [#allocation9], %s296
        %s298 = sand.u32 %s133, 1
        %s299 = smul.addr %s298, 16
        %s300 = scalar_lea.vmem [#allocation10], %s299
        // Predicated region
        $region41: #{tpu_custom_call.1} parent=31 // pred_check
          %p301 = pneg %p146
        $region42: #{tpu_custom_call.1} parent=31 // pred_check_branch
          %303 = sbr.rel (%p301) target = $region44
        $region43: #{tpu_custom_call.1} parent=31 // pred_region
          %305 = dma.done %s297, 256
        $region44: #{tpu_custom_call.1} parent=31 // pred_fallthru
          _
        %s306 = sand.u32 %s61, 1
        %s307 = scalar_lea.sflag [#allocation6], %s306
        %s308 = sand.u32 %s61, 1
        %s309 = smul.addr %s308, 16
        %s310 = scalar_lea.vmem [#allocation5], %s309
        %p311 = pneg %p74
        %p312 = pneg %p71
        %s313 = sand.u32 %s32, 1
        %s314 = scalar_lea.sflag [#allocation9], %s313
        %s315 = sand.u32 %s105, 1
        %s316 = smul.addr %s315, 24
        %s317 = scalar_lea.vmem [#allocation8], %s316
        %p318 = pneg %p118
        %p319 = pneg %p115
        %s320 = sand.u32 %s32, 1
        %s321 = scalar_lea.sflag [#allocation9], %s320
        %s322 = sand.u32 %s133, 1
        %s323 = smul.addr %s322, 16
        %s324 = scalar_lea.vmem [#allocation10], %s323
        %p325 = pneg %p146
        %p326 = pneg %p143
        %p327 = pneg %p174
        %p328 = pneg %p171
        %s329 = sand.u32 %s161, 1
        %s330 = scalar_lea.sflag [#allocation7], %s329
        %s331 = sand.u32 %s161, 1
        %s332 = smul.addr %s331, 16
        %s333 = scalar_lea.vmem [#allocation11], %s332
        %s334 = sshra.s32 %s39, 7
        %s335 = sand.u32 %s39, 127
        %s336 = sadd.s32 %s334, %s37
        %s337 = smul.u32 %s336, 128
        %s338 = sshra.s32 %s39, 7
        %s339 = sand.u32 %s39, 127
        %s340 = sadd.s32 %s337, %s339
        %s341 = sld [smem:[#allocation4 + %s340]]
        %p342 = scmp.eq.s32.totalorder %s39, 0
        // Predicated region
        $region45: #{tpu_custom_call.1} parent=31 // pred_check
          %p343 = pneg %p342
        $region46: #{tpu_custom_call.1} parent=31 // pred_check_branch
          %345 = sbr.rel (%p343) target = $region48
        $region47: #{tpu_custom_call.1} parent=31 // pred_region
          %v346 = vld [vmem:[%s280] sm:$0xff]
          %v347 = vld [vmem:[%s280 + $0x8] sm:$0xff]
          %348 = vst [vmem:[%s333] sm:$0xff] %v346
          %349 = vst [vmem:[%s333 + $0x8] sm:$0xff] %v347
        $region48: #{tpu_custom_call.1} parent=31 // pred_fallthru
          _
        %v350 = vlaneseq
        %v351 = vand.u32 %v350, 127
        %v352 = vadd.s32 %v351, 128
        %vm353 = vcmp.lt.s32.totalorder %v351, 0
        %v354 = vsub.s32 0, %v351
        %v355 = vsel %vm353, %v354, %v351
        %v356 = vshrl.u32 %v355, 4
        %v357 = vand.u32 %v355, 15
        %v358 = vsub.s32 0, %v357
        %v359 = vsel %vm353, %v358, %v357
        %vm360 = vcmp.lt.s32.totalorder %v352, 0
        %v361 = vsub.s32 0, %v352
        %v362 = vsel %vm360, %v361, %v352
        %v363 = vshrl.u32 %v362, 4
        %v364 = vand.u32 %v362, 15
        %v365 = vsub.s32 0, %v364
        %v366 = vsel %vm360, %v365, %v364
        %vm367 = vcmp.ne.s32.totalorder %v359, 0
        %vm368 = vcmp.ne.s32.totalorder %v366, 0
        %vm369 = vcmp.lt.s32.totalorder %v359, 0
        %vm370 = vcmp.lt.s32.totalorder %v366, 0
        %vm371 = vmand %vm369, %vm367
        %vm372 = vmand %vm370, %vm368
        %v373 = vadd.s32 %v359, 16
        %v374 = vadd.s32 %v366, 16
        %v375 = vsel %vm371, %v373, %v359
        %v376 = vsel %vm372, %v374, %v366
        %vm377 = vcmp.ne.s32.totalorder %v375, 0
        %vm378 = vcmp.ne.s32.totalorder %v376, 0
        %vm379 = vcmp.ne.s32.totalorder %v375, 15
        %vm380 = vcmp.ne.s32.totalorder %v376, 15
        %v381 = vld [vmem:[%s290] sm:$0xff]
        %v382 = vld [vmem:[%s290 + $0x8] sm:$0xff]
        %v383 = vld [vmem:[%s290 + $0x10] sm:$0xff]
        %v384 = vsel %vm377, %v381, 0.0
        %v385 = vsel %vm378, %v382, 0.0
        %386 = vst [vmem:[#allocation2] sm:$0xff] %v384
        %387 = vst [vmem:[#allocation2 + $0x8] sm:$0xff] %v385
        %391 = vrot.lane.b32.xlu0 %v381, 127
        %v392 = vpop.permute.xlu0 %391
        %393 = vrot.lane.b32.xlu0 %v382, 127
        %v394 = vpop.permute.xlu0 %393
        %395 = vrot.lane.b32.xlu0 %v383, 127
        %v396 = vpop.permute.xlu0 %395
        %vm397 = vcmask 1039360
        %v398 = vsel %vm397, %v392, %v394
        %v399 = vsel %vm397, %v394, %v396
        %402 = vst [vmem:[#allocation2 + $0x10] sm:$0xff] %v398
        %403 = vst [vmem:[#allocation2 + $0x18] sm:$0xff] %v399
        %404 = vrot.lane.b32.xlu0 %v381, 126
        %v405 = vpop.permute.xlu0 %404
        %406 = vrot.lane.b32.xlu0 %v382, 126
        %v407 = vpop.permute.xlu0 %406
        %408 = vrot.lane.b32.xlu0 %v383, 126
        %v409 = vpop.permute.xlu0 %408
        %vm410 = vcmask 1031168
        %v411 = vsel %vm410, %v405, %v407
        %v412 = vsel %vm410, %v407, %v409
        %v415 = vsel %vm379, %v411, 0.0
        %v416 = vsel %vm380, %v412, 0.0
        %417 = vst [vmem:[#allocation2 + $0x20] sm:$0xff] %v415
        %418 = vst [vmem:[#allocation2 + $0x28] sm:$0xff] %v416
        %419 = vrot.lane.b32.xlu0 %v381, 112
        %v420 = vpop.permute.xlu0 %419
        %421 = vrot.lane.b32.xlu0 %v382, 112
        %v422 = vpop.permute.xlu0 %421
        %423 = vrot.lane.b32.xlu0 %v383, 112
        %v424 = vpop.permute.xlu0 %423
        %vm425 = vcmask 916480
        %v426 = vsel %vm425, %v420, %v422
        %v427 = vsel %vm425, %v422, %v424
        %v430 = vsel %vm377, %v426, 0.0
        %v431 = vsel %vm378, %v427, 0.0
        %432 = vst [vmem:[#allocation2 + $0x30] sm:$0xff] %v430
        %433 = vst [vmem:[#allocation2 + $0x38] sm:$0xff] %v431
        %434 = vrot.lane.b32.xlu0 %v381, 111
        %v435 = vpop.permute.xlu0 %434
        %436 = vrot.lane.b32.xlu0 %v382, 111
        %v437 = vpop.permute.xlu0 %436
        %438 = vrot.lane.b32.xlu0 %v383, 111
        %v439 = vpop.permute.xlu0 %438
        %vm440 = vcmask 908288
        %v441 = vsel %vm440, %v435, %v437
        %v442 = vsel %vm440, %v437, %v439
        %445 = vst [vmem:[#allocation2 + $0x40] sm:$0xff] %v441
        %446 = vst [vmem:[#allocation2 + $0x48] sm:$0xff] %v442
        %447 = vrot.lane.b32.xlu0 %v381, 110
        %v448 = vpop.permute.xlu0 %447
        %449 = vrot.lane.b32.xlu0 %v382, 110
        %v450 = vpop.permute.xlu0 %449
        %451 = vrot.lane.b32.xlu0 %v383, 110
        %v452 = vpop.permute.xlu0 %451
        %vm453 = vcmask 900096
        %v454 = vsel %vm453, %v448, %v450
        %v455 = vsel %vm453, %v450, %v452
        %v458 = vsel %vm379, %v454, 0.0
        %v459 = vsel %vm380, %v455, 0.0
        %460 = vst [vmem:[#allocation2 + $0x50] sm:$0xff] %v458
        %461 = vst [vmem:[#allocation2 + $0x58] sm:$0xff] %v459
        %462 = vrot.lane.b32.xlu0 %v381, 96
        %v463 = vpop.permute.xlu0 %462
        %464 = vrot.lane.b32.xlu0 %v382, 96
        %v465 = vpop.permute.xlu0 %464
        %466 = vrot.lane.b32.xlu0 %v383, 96
        %v467 = vpop.permute.xlu0 %466
        %vm468 = vcmask 785408
        %v469 = vsel %vm468, %v463, %v465
        %v470 = vsel %vm468, %v465, %v467
        %v473 = vsel %vm377, %v469, 0.0
        %v474 = vsel %vm378, %v470, 0.0
        %475 = vst [vmem:[#allocation2 + $0x60] sm:$0xff] %v473
        %476 = vst [vmem:[#allocation2 + $0x68] sm:$0xff] %v474
        %477 = vrot.lane.b32.xlu0 %v381, 95
        %v478 = vpop.permute.xlu0 %477
        %479 = vrot.lane.b32.xlu0 %v382, 95
        %v480 = vpop.permute.xlu0 %479
        %481 = vrot.lane.b32.xlu0 %v383, 95
        %v482 = vpop.permute.xlu0 %481
        %vm483 = vcmask 777216
        %v484 = vsel %vm483, %v478, %v480
        %v485 = vsel %vm483, %v480, %v482
        %488 = vst [vmem:[#allocation2 + $0x70] sm:$0xff] %v484
        %489 = vst [vmem:[#allocation2 + $0x78] sm:$0xff] %v485
        %490 = vrot.lane.b32.xlu0 %v381, 94
        %v491 = vpop.permute.xlu0 %490
        %492 = vrot.lane.b32.xlu0 %v382, 94
        %v493 = vpop.permute.xlu0 %492
        %494 = vrot.lane.b32.xlu0 %v383, 94
        %v495 = vpop.permute.xlu0 %494
        %vm496 = vcmask 769024
        %v497 = vsel %vm496, %v491, %v493
        %v498 = vsel %vm496, %v493, %v495
        %v501 = vsel %vm379, %v497, 0.0
        %v502 = vsel %vm380, %v498, 0.0
        %503 = vst [vmem:[#allocation2 + $0x80] sm:$0xff] %v501
        %504 = vst [vmem:[#allocation2 + $0x88] sm:$0xff] %v502
        %v505 = vld [vmem:[%s300] sm:$0xff]
        %v506 = vld [vmem:[%s300 + $0x8] sm:$0xff]
        %v507 = vld [vmem:[#allocation2] sm:$0xff]
        %v508 = vld [vmem:[#allocation2 + $0x8] sm:$0xff]
        %v509 = vld [vmem:[#allocation2 + $0x10] sm:$0xff]
        %v510 = vld [vmem:[#allocation2 + $0x18] sm:$0xff]
        %v511 = vld [vmem:[#allocation2 + $0x20] sm:$0xff]
        %v512 = vld [vmem:[#allocation2 + $0x28] sm:$0xff]
        %v513 = vld [vmem:[#allocation2 + $0x30] sm:$0xff]
        %v514 = vld [vmem:[#allocation2 + $0x38] sm:$0xff]
        %v515 = vld [vmem:[#allocation2 + $0x40] sm:$0xff]
        %v516 = vld [vmem:[#allocation2 + $0x48] sm:$0xff]
        %v517 = vld [vmem:[#allocation2 + $0x50] sm:$0xff]
        %v518 = vld [vmem:[#allocation2 + $0x58] sm:$0xff]
        %v519 = vld [vmem:[#allocation2 + $0x60] sm:$0xff]
        %v520 = vld [vmem:[#allocation2 + $0x68] sm:$0xff]
        %v521 = vld [vmem:[#allocation2 + $0x70] sm:$0xff]
        %v522 = vld [vmem:[#allocation2 + $0x78] sm:$0xff]
        %v523 = vld [vmem:[#allocation2 + $0x80] sm:$0xff]
        %v524 = vld [vmem:[#allocation2 + $0x88] sm:$0xff]
        %vm525 = vcmask 588800
        %v527 = vsel %vm525, %v505, 0
        %v530 = vsel %vm525, %v506, 0
        %532 = vmatpush.msra.mxu0 0.0
        %533 = vmatpush.msra.mxu0 0.0
        %534 = vmatpush.msra.mxu0 0.0
        %535 = vmatpush.msra.mxu0 0.0
        %536 = vmatpush.msra.mxu0 0.0
        %537 = vmatpush.msra.mxu0 0.0
        %538 = vmatpush.msra.mxu0 0.0
        %539 = vmatpush.msra.mxu0 %v523
        %540 = vmatpush.msra.mxu0 %v521
        %541 = vmatpush.msra.mxu0 %v519
        %542 = vmatpush.msra.mxu0 %v517
        %543 = vmatpush.msra.mxu0 %v515
        %544 = vmatpush.msra.mxu0 %v513
        %545 = vmatpush.msra.mxu0 %v511
        %546 = vmatpush.msra.mxu0 %v509
        %547 = vmatpush.msra.mxu0 %v507
        %548 = vmatmul.f32.gmra.mxu0 %v527
        %v549 = vpop.f32.mrf.mxu0
        %v550 = vadd.f32 0.0, %v549
        %551 = vmatmul.f32.gmra.mxu0 %v530
        %v552 = vpop.f32.mrf.mxu0
        %v553 = vadd.f32 0.0, %v552
        %554 = vdwg.mxu0
        %555 = vmatpush.msra.mxu0 0.0
        %556 = vmatpush.msra.mxu0 0.0
        %557 = vmatpush.msra.mxu0 0.0
        %558 = vmatpush.msra.mxu0 0.0
        %559 = vmatpush.msra.mxu0 0.0
        %560 = vmatpush.msra.mxu0 0.0
        %561 = vmatpush.msra.mxu0 0.0
        %562 = vmatpush.msra.mxu0 %v524
        %563 = vmatpush.msra.mxu0 %v522
        %564 = vmatpush.msra.mxu0 %v520
        %565 = vmatpush.msra.mxu0 %v518
        %566 = vmatpush.msra.mxu0 %v516
        %567 = vmatpush.msra.mxu0 %v514
        %568 = vmatpush.msra.mxu0 %v512
        %569 = vmatpush.msra.mxu0 %v510
        %570 = vmatpush.msra.mxu0 %v508
        %571 = vmatmul.f32.gmra.mxu0 %v527
        %v572 = vpop.f32.mrf.mxu0
        %v573 = vadd.f32 0.0, %v572
        %574 = vmatmul.f32.gmra.mxu0 %v530
        %v575 = vpop.f32.mrf.mxu0
        %v576 = vadd.f32 0.0, %v575
        %577 = vdwg.mxu0
        %v578 = vld [vmem:[%s333] sm:$0xff]
        %v579 = vld [vmem:[%s333 + $0x8] sm:$0xff]
        %v580 = vxor.u32 %v550, 2147483648
        %v581 = vxor.u32 %v573, 2147483648
        %v582 = vmul.f32 %v580, 1.442695
        %v583 = vpow.pop %v582
        %v584 = vmul.f32 %v581, 1.442695
        %v585 = vpow.pop %v584
        %v586 = vadd.f32 %v583, 1.0
        %v587 = vadd.f32 %v585, 1.0
        %v588 = vrcp.pop %v586
        %v589 = vmul.f32 %v586, %v588
        %v590 = vsub.f32 1.0, %v589
        %v591 = vmul.f32 %v588, %v590
        %v592 = vadd.f32 %v588, %v591
        %vm593 = vweird.f32 %v586
        %vm594 = vweird.f32 %v588
        %vm595 = vmor %vm593, %vm594
        %v596 = vsel %vm595, %v588, %v592
        %v597 = vand.u32 2147483647, %v586
        %vm598 = vcmp.eq.f32.partialorder %v597, 8.507059e+37
        %v599 = vand.u32 %v586, 2147483648
        %v600 = vor.u32 1.1754944e-38, %v599
        %v601 = vsel %vm598, %v600, %v596
        %v602 = vmul.f32 1.0, %v601
        %v603 = vrcp.pop %v587
        %v604 = vmul.f32 %v587, %v603
        %v605 = vsub.f32 1.0, %v604
        %v606 = vmul.f32 %v603, %v605
        %v607 = vadd.f32 %v603, %v606
        %vm608 = vweird.f32 %v587
        %vm609 = vweird.f32 %v603
        %vm610 = vmor %vm608, %vm609
        %v611 = vsel %vm610, %v603, %v607
        %v612 = vand.u32 2147483647, %v587
        %vm613 = vcmp.eq.f32.partialorder %v612, 8.507059e+37
        %v614 = vand.u32 %v587, 2147483648
        %v615 = vor.u32 1.1754944e-38, %v614
        %v616 = vsel %vm613, %v615, %v611
        %v617 = vmul.f32 1.0, %v616
        %v618 = vmul.f32 %v602, %v553
        %v619 = vmul.f32 %v617, %v576
        %v620 = vadd.f32 %v578, %v618
        %v621 = vadd.f32 %v579, %v619
        %622 = vst [vmem:[%s333] sm:$0xff] %v620
        %623 = vst [vmem:[%s333 + $0x8] sm:$0xff] %v621
        %s624 = sand.u32 %s161, 1
        %s625 = scalar_lea.sflag [#allocation7], %s624
        %s626 = sand.u32 %s161, 1
        %s627 = smul.addr %s626, 16
        %s628 = scalar_lea.vmem [#allocation11], %s627
        // Predicated region
        $region49: #{tpu_custom_call.1} parent=31 // pred_check
          %p629 = pneg %p171
        $region50: #{tpu_custom_call.1} parent=31 // pred_check_branch
          %631 = sbr.rel (%p629) target = $region52
        $region51: #{tpu_custom_call.1} parent=31 // pred_region
          %633 = vsyncadd %s625, 0
          %s634 = smul.addr %s38, 2
          %s635 = smul.addr %s37, 4
          %s636 = sadd.s32 %s634, %s635
          %s637 = smul.addr %s636, 8
          %s638 = scalar_lea.hbm %s4, %s637
          %s640 = sshll.u32 %s628, 4
          %s641 = int_to_ptr.vmem [resolvable:$true] %s640
          %s642 = sshll.u32 %s638, 4
          %s643 = int_to_ptr.hbm [resolvable:$true] %s642
          %645 = dma.vmem_to_hbm [thread:$0]  %s641, 256, %s643, %s625
        $region52: #{tpu_custom_call.1} parent=31 // pred_fallthru
          _
      $region32: #{tpu_custom_call.1} parent=5 // pred_fallthru
        _
      %p646 = scmp.le.s32.totalorder 2, %s27
      // Predicated region
      $region53: #{tpu_custom_call.1} parent=5 // pred_check
        %p647 = pneg %p646
      $region54: #{tpu_custom_call.1} parent=5 // pred_check_branch
        %649 = sbr.rel (%p647) target = $region56
      $region55: #{tpu_custom_call.1} parent=5 // pred_region
        %s650 = ssub.s32 %s27, 2
        // Predicated region
        $region57: #{tpu_custom_call.1} parent=55 // pred_check
          %p651 = pneg %p177
        $region58: #{tpu_custom_call.1} parent=55 // pred_check_branch
          %653 = sbr.rel (%p651) target = $region60
        $region59: #{tpu_custom_call.1} parent=55 // pred_region
          %s654 = sand.u32 %s162, 1
          %s655 = scalar_lea.sflag [#allocation7], %s654
          %s656 = sand.u32 %s162, 1
          %s657 = smul.addr %s656, 16
          %s658 = scalar_lea.vmem [#allocation11], %s657
          %660 = dma.done %s655, 256
        $region60: #{tpu_custom_call.1} parent=55 // pred_fallthru
          _
      $region56: #{tpu_custom_call.1} parent=5 // pred_fallthru
        _
    $region6: #{tpu_custom_call.1} parent=1 // loop_footer
      %s31 = sadd.s32 1, %s27
    $region7: #{tpu_custom_call.1} parent=1 // loop_footer_branch
      %26 = sbr.rel target = $region3
    $region8: #{tpu_custom_call.1} parent=1 // loop_exit
      _
    %661 = vsyncpa [#allocation6], 1
    %s662 = scalar_lea.sflag [#allocation6], 1
    %663 = vsyncpa %s662, 1
    %664 = vsyncpa [#allocation9], 1
    %s665 = scalar_lea.sflag [#allocation9], 1
    %666 = vsyncpa %s665, 1
    %667 = vsyncpa [#allocation7], 1
    %s668 = scalar_lea.sflag [#allocation7], 1
    %669 = vsyncpa %s668, 1

</llo_original>
